<compile_context>
chip_gen: v6e
topology: v6e:2x2x1
jax: 0.10.0
libtpu: 0.0.40
codegen_flags: <defaults>
</compile_context>

<pallas_src>
import jax
import jax.numpy as jnp
from jax.experimental import pallas as pl
from jax.experimental.pallas import tpu as pltpu


def _relu_div_kernel(x_ref, o_ref):
    # x_ref / o_ref: (TN, HW) lane-dense slabs.
    x2 = jnp.maximum(x_ref[...], 0.0)          # relu (t1 is identity resample)
    # v4 == x2 (bilinear resize with identical in/out size is identity), so
    # v5 = x2 / x2 : exactly 1.0 where x > 0, NaN (0/0) where x <= 0 — same as eager.
    o_ref[...] = x2 / x2


def model_forward(x: jnp.ndarray) -> jnp.ndarray:
    """x: (B, C, H, W) float32, NCHW. Returns v5 with shape (B, C, 64, 64)."""
    B, C, H, W = x.shape
    Ho, Wo = 64, 64                             # size=[64] -> (64, 64)
    assert (H, W) == (Ho, Wo), "x2 / v4 requires matching spatial shapes"

    N = B * C
    HW = H * W                                  # 4096: multiple of 128 -> lane-dense

    # Rows per block: as large as fits comfortably in scoped VMEM (v7x-safe),
    # rounded to the sublane multiple of 8.
    TN = min(256, max(8, ((N + 7) // 8) * 8))
    Np = ((N + TN - 1) // TN) * TN

    xf = x.reshape(N, HW).astype(jnp.float32)
    if Np != N:
        xf = jnp.pad(xf, ((0, Np - N), (0, 0)))  # padded rows sliced off below

    out = pl.pallas_call(
        _relu_div_kernel,
        out_shape=jax.ShapeDtypeStruct((Np, HW), jnp.float32),
        grid_spec=pltpu.PrefetchScalarGridSpec(
            num_scalar_prefetch=0,
            grid=(Np // TN,),
            in_specs=[pl.BlockSpec((TN, HW), lambda n: (n, 0))],
            out_specs=pl.BlockSpec((TN, HW), lambda n: (n, 0)),
        ),
        compiler_params=pltpu.CompilerParams(
            dimension_semantics=("parallel",)),
    )(xf)

    return out[:N].reshape(B, C, Ho, Wo)


if __name__ == "__main__":
    key = jax.random.PRNGKey(0)
    x1 = jax.random.normal(key, (2, 4, 64, 64), dtype=jnp.float32)
    v5 = model_forward(x1)
    jax.block_until_ready(v5)
    assert v5.shape == (2, 4, 64, 64)

    # Where x1 > 0: v4 == x2 (identity resize), so v5 must be exactly 1.
    pos = x1 > 0
    ones = jnp.where(pos, v5, 1.0)
    assert bool(jnp.allclose(ones, 1.0, atol=1e-6))
    # Where x1 <= 0: relu gives 0 and 0/0 = NaN, matching eager PyTorch.
    assert bool(jnp.all(jnp.isnan(jnp.where(pos, jnp.nan, v5))))
    print("KERNEL_OK")
</pallas_src>

<mosaic_0001>
module attributes {stable_mosaic.version = 11 : i64} {
  func.func @_relu_div_kernel(%arg0: i32, %arg1: memref<8x4096xf32, #tpu.memory_space<vmem>>, %arg2: memref<8x4096xf32, #tpu.memory_space<vmem>>) attributes {dimension_semantics = [#tpu.dimension_semantics<parallel>], iteration_bounds = array<i64: 1>, scalar_prefetch = 0 : i64, scratch_operands = 0 : i64, tpu.core_type = #tpu.core_type<tc>, window_params = [{transform_indices = @transform_0, window_bounds = array<i64: 8, 4096>}, {transform_indices = @transform_1, window_bounds = array<i64: 8, 4096>}]} {
    %c0 = arith.constant 0 : index
    %c0_0 = arith.constant 0 : index
    %0 = vector.load %arg1[%c0, %c0_0] : memref<8x4096xf32, #tpu.memory_space<vmem>>, vector<8x4096xf32>
    %cst = arith.constant 0.000000e+00 : f32
    %1 = vector.broadcast %cst : f32 to vector<8x4096xf32>
    %2 = arith.maximumf %0, %1 : vector<8x4096xf32>
    %3 = arith.divf %2, %2 : vector<8x4096xf32>
    %c0_1 = arith.constant 0 : index
    %c0_2 = arith.constant 0 : index
    %4 = vector.load %arg2[%c0_1, %c0_2] : memref<8x4096xf32, #tpu.memory_space<vmem>>, vector<8x4096xf32>
    tpu.vector_store %arg2[%c0_1, %c0_2], %3 {strides = array<i32>} : memref<8x4096xf32, #tpu.memory_space<vmem>>, vector<8x4096xf32>,
    return
  }
  func.func @transform_0(%arg0: i32) -> (i32, i32) {
    %c0_i32 = arith.constant 0 : i32
    %c0_i32_0 = arith.constant 0 : i32
    return %arg0, %c0_i32 : i32, i32
  }
  func.func @transform_1(%arg0: i32) -> (i32, i32) {
    %c0_i32 = arith.constant 0 : i32
    %c0_i32_0 = arith.constant 0 : i32
    return %arg0, %c0_i32 : i32, i32
  }
}

</mosaic_0001>

<llo_original>
// kernel: tpu_custom_call.1
$region0: #{tpu_custom_call.1}
  #allocation0 [shape = 'u32[]', space=smem, size = 0x4, offset = 0x4, fixed_abs, tag = 'smem constant byte address 0x4 - core index']
  #allocation1 [shape = 'u32[144,128]{1,0:T(1,128)}', space=vmem, size = 0x12000, scoped, tag = 'internal scratch']
  %s0 = inlined_call_operand.hbm [shape: f32[8,4096], index: 0, kind: input, shape index: {}]
  %s1 = inlined_call_operand.hbm [shape: f32[8,4096], index: 1, kind: output, shape index: {}]
  %s2 = sld [smem:[#allocation0]]
  $region18: #{tpu_custom_call.1} parent=0
    _
  %s4 = ssub.s32 1, %s2
  %s5 = scalar_select 0, %s4, %s2
  $region1: #{tpu_custom_call.1} parent=0
    #allocation2 [shape = 'u8[131072]{0}', space=vmem, size = 0x20000, scoped, tag = 'input window, operand 0, single buffered']
    #allocation3 [shape = 's32[1]{0}', space=sflag, size = 0x4, scoped, tag = 'scoped memory for tpu_custom_call.1']
    #allocation4 [shape = 's32[1]{0}', space=sflag, size = 0x4, scoped, tag = 'scoped memory for tpu_custom_call.1']
    #allocation5 [shape = 'u8[131072]{0}', space=vmem, size = 0x20000, scoped, tag = 'output window, operand 0, single buffered']
    %6 = vsyncpa [#allocation3], 0
    %7 = vsyncpa [#allocation4], 0
    // Predicated region
    $region2: #{tpu_custom_call.1} parent=1 // pred_check
      _
    $region3: #{tpu_custom_call.1} parent=1 // pred_check_branch
      %9 = sbr.rel (0) target = $region5
    $region4: #{tpu_custom_call.1} parent=1 // pred_region
      %s11 = ssub.s32 4096, 4096
      %12 = vsyncadd [#allocation3], %s11
      %s14 = sshll.u32 [#allocation2], 4
      %s15 = int_to_ptr.vmem [resolvable:$true] %s14
      %17 = dma.hbm_to_vmem [thread:$0]  %s0, 4096, %s15, [#allocation3]
    $region5: #{tpu_custom_call.1} parent=1 // pred_fallthru
      _
    // Predicated region
    $region6: #{tpu_custom_call.1} parent=1 // pred_check
      _
    $region7: #{tpu_custom_call.1} parent=1 // pred_check_branch
      %19 = sbr.rel (0) target = $region9
    $region8: #{tpu_custom_call.1} parent=1 // pred_region
      %20 = dma.done [#allocation3], 4096
    $region9: #{tpu_custom_call.1} parent=1 // pred_fallthru
      _
    %v21 = vld [vmem:[#allocation2] sm:$0xff]
    %v22 = vld [vmem:[#allocation2 + $0x8] sm:$0xff]
    %v23 = vld [vmem:[#allocation2 + $0x10] sm:$0xff]
    %v24 = vld [vmem:[#allocation2 + $0x18] sm:$0xff]
    %v25 = vld [vmem:[#allocation2 + $0x20] sm:$0xff]
    %v26 = vld [vmem:[#allocation2 + $0x28] sm:$0xff]
    %v27 = vld [vmem:[#allocation2 + $0x30] sm:$0xff]
    %v28 = vld [vmem:[#allocation2 + $0x38] sm:$0xff]
    %v29 = vld [vmem:[#allocation2 + $0x40] sm:$0xff]
    %v30 = vld [vmem:[#allocation2 + $0x48] sm:$0xff]
    %v31 = vld [vmem:[#allocation2 + $0x50] sm:$0xff]
    %v32 = vld [vmem:[#allocation2 + $0x58] sm:$0xff]
    %v33 = vld [vmem:[#allocation2 + $0x60] sm:$0xff]
    %v34 = vld [vmem:[#allocation2 + $0x68] sm:$0xff]
    %v35 = vld [vmem:[#allocation2 + $0x70] sm:$0xff]
    %v36 = vld [vmem:[#allocation2 + $0x78] sm:$0xff]
    %v37 = vld [vmem:[#allocation2 + $0x80] sm:$0xff]
    %v38 = vld [vmem:[#allocation2 + $0x88] sm:$0xff]
    %v39 = vld [vmem:[#allocation2 + $0x90] sm:$0xff]
    %v40 = vld [vmem:[#allocation2 + $0x98] sm:$0xff]
    %v41 = vld [vmem:[#allocation2 + $0xa0] sm:$0xff]
    %v42 = vld [vmem:[#allocation2 + $0xa8] sm:$0xff]
    %v43 = vld [vmem:[#allocation2 + $0xb0] sm:$0xff]
    %v44 = vld [vmem:[#allocation2 + $0xb8] sm:$0xff]
    %v45 = vld [vmem:[#allocation2 + $0xc0] sm:$0xff]
    %v46 = vld [vmem:[#allocation2 + $0xc8] sm:$0xff]
    %v47 = vld [vmem:[#allocation2 + $0xd0] sm:$0xff]
    %v48 = vld [vmem:[#allocation2 + $0xd8] sm:$0xff]
    %v49 = vld [vmem:[#allocation2 + $0xe0] sm:$0xff]
    %v50 = vld [vmem:[#allocation2 + $0xe8] sm:$0xff]
    %v51 = vld [vmem:[#allocation2 + $0xf0] sm:$0xff]
    %v52 = vld [vmem:[#allocation2 + $0xf8] sm:$0xff]
    %v53 = vmax.f32 %v21, 0.0
    %v54 = vmax.f32 %v22, 0.0
    %v55 = vmax.f32 %v23, 0.0
    %v56 = vmax.f32 %v24, 0.0
    %v57 = vmax.f32 %v25, 0.0
    %v58 = vmax.f32 %v26, 0.0
    %v59 = vmax.f32 %v27, 0.0
    %v60 = vmax.f32 %v28, 0.0
    %v61 = vmax.f32 %v29, 0.0
    %v62 = vmax.f32 %v30, 0.0
    %v63 = vmax.f32 %v31, 0.0
    %v64 = vmax.f32 %v32, 0.0
    %v65 = vmax.f32 %v33, 0.0
    %v66 = vmax.f32 %v34, 0.0
    %v67 = vmax.f32 %v35, 0.0
    %v68 = vmax.f32 %v36, 0.0
    %v69 = vmax.f32 %v37, 0.0
    %v70 = vmax.f32 %v38, 0.0
    %v71 = vmax.f32 %v39, 0.0
    %v72 = vmax.f32 %v40, 0.0
    %v73 = vmax.f32 %v41, 0.0
    %v74 = vmax.f32 %v42, 0.0
    %v75 = vmax.f32 %v43, 0.0
    %v76 = vmax.f32 %v44, 0.0
    %v77 = vmax.f32 %v45, 0.0
    %v78 = vmax.f32 %v46, 0.0
    %v79 = vmax.f32 %v47, 0.0
    %v80 = vmax.f32 %v48, 0.0
    %v81 = vmax.f32 %v49, 0.0
    %v82 = vmax.f32 %v50, 0.0
    %v83 = vmax.f32 %v51, 0.0
    %v84 = vmax.f32 %v52, 0.0
    %v85 = vrcp.pop %v53
    %v86 = vmul.f32 %v53, %v85
    %v87 = vrcp.pop %v54
    %v88 = vmul.f32 %v54, %v87
    %v89 = vrcp.pop %v55
    %v90 = vmul.f32 %v55, %v89
    %v91 = vrcp.pop %v56
    %v92 = vmul.f32 %v56, %v91
    %v93 = vrcp.pop %v57
    %v94 = vmul.f32 %v57, %v93
    %v95 = vrcp.pop %v58
    %v96 = vmul.f32 %v58, %v95
    %v97 = vrcp.pop %v59
    %v98 = vmul.f32 %v59, %v97
    %v99 = vrcp.pop %v60
    %v100 = vmul.f32 %v60, %v99
    %v101 = vrcp.pop %v61
    %v102 = vmul.f32 %v61, %v101
    %v103 = vrcp.pop %v62
    %v104 = vmul.f32 %v62, %v103
    %v105 = vrcp.pop %v63
    %v106 = vmul.f32 %v63, %v105
    %v107 = vrcp.pop %v64
    %v108 = vmul.f32 %v64, %v107
    %v109 = vrcp.pop %v65
    %v110 = vmul.f32 %v65, %v109
    %v111 = vrcp.pop %v66
    %v112 = vmul.f32 %v66, %v111
    %v113 = vrcp.pop %v67
    %v114 = vmul.f32 %v67, %v113
    %v115 = vrcp.pop %v68
    %v116 = vmul.f32 %v68, %v115
    %v117 = vrcp.pop %v69
    %v118 = vmul.f32 %v69, %v117
    %v119 = vrcp.pop %v70
    %v120 = vmul.f32 %v70, %v119
    %v121 = vrcp.pop %v71
    %v122 = vmul.f32 %v71, %v121
    %v123 = vrcp.pop %v72
    %v124 = vmul.f32 %v72, %v123
    %v125 = vrcp.pop %v73
    %v126 = vmul.f32 %v73, %v125
    %v127 = vrcp.pop %v74
    %v128 = vmul.f32 %v74, %v127
    %v129 = vrcp.pop %v75
    %v130 = vmul.f32 %v75, %v129
    %v131 = vrcp.pop %v76
    %v132 = vmul.f32 %v76, %v131
    %v133 = vrcp.pop %v77
    %v134 = vmul.f32 %v77, %v133
    %v135 = vrcp.pop %v78
    %v136 = vmul.f32 %v78, %v135
    %v137 = vrcp.pop %v79
    %v138 = vmul.f32 %v79, %v137
    %v139 = vrcp.pop %v80
    %v140 = vmul.f32 %v80, %v139
    %v141 = vrcp.pop %v81
    %v142 = vmul.f32 %v81, %v141
    %v143 = vrcp.pop %v82
    %v144 = vmul.f32 %v82, %v143
    %v145 = vrcp.pop %v83
    %v146 = vmul.f32 %v83, %v145
    %v147 = vrcp.pop %v84
    %v148 = vmul.f32 %v84, %v147
    %149 = vst [vmem:[#allocation5] sm:$0xff] %v86
    %150 = vst [vmem:[#allocation5 + $0x8] sm:$0xff] %v88
    %151 = vst [vmem:[#allocation5 + $0x10] sm:$0xff] %v90
    %152 = vst [vmem:[#allocation5 + $0x18] sm:$0xff] %v92
    %153 = vst [vmem:[#allocation5 + $0x20] sm:$0xff] %v94
    %154 = vst [vmem:[#allocation5 + $0x28] sm:$0xff] %v96
    %155 = vst [vmem:[#allocation5 + $0x30] sm:$0xff] %v98
    %156 = vst [vmem:[#allocation5 + $0x38] sm:$0xff] %v100
    %157 = vst [vmem:[#allocation5 + $0x40] sm:$0xff] %v102
    %158 = vst [vmem:[#allocation5 + $0x48] sm:$0xff] %v104
    %159 = vst [vmem:[#allocation5 + $0x50] sm:$0xff] %v106
    %160 = vst [vmem:[#allocation5 + $0x58] sm:$0xff] %v108
    %161 = vst [vmem:[#allocation5 + $0x60] sm:$0xff] %v110
    %162 = vst [vmem:[#allocation5 + $0x68] sm:$0xff] %v112
    %163 = vst [vmem:[#allocation5 + $0x70] sm:$0xff] %v114
    %164 = vst [vmem:[#allocation5 + $0x78] sm:$0xff] %v116
    %165 = vst [vmem:[#allocation5 + $0x80] sm:$0xff] %v118
    %166 = vst [vmem:[#allocation5 + $0x88] sm:$0xff] %v120
    %167 = vst [vmem:[#allocation5 + $0x90] sm:$0xff] %v122
    %168 = vst [vmem:[#allocation5 + $0x98] sm:$0xff] %v124
    %169 = vst [vmem:[#allocation5 + $0xa0] sm:$0xff] %v126
    %170 = vst [vmem:[#allocation5 + $0xa8] sm:$0xff] %v128
    %171 = vst [vmem:[#allocation5 + $0xb0] sm:$0xff] %v130
    %172 = vst [vmem:[#allocation5 + $0xb8] sm:$0xff] %v132
    %173 = vst [vmem:[#allocation5 + $0xc0] sm:$0xff] %v134
    %174 = vst [vmem:[#allocation5 + $0xc8] sm:$0xff] %v136
    %175 = vst [vmem:[#allocation5 + $0xd0] sm:$0xff] %v138
    %176 = vst [vmem:[#allocation5 + $0xd8] sm:$0xff] %v140
    %177 = vst [vmem:[#allocation5 + $0xe0] sm:$0xff] %v142
    %178 = vst [vmem:[#allocation5 + $0xe8] sm:$0xff] %v144
    %179 = vst [vmem:[#allocation5 + $0xf0] sm:$0xff] %v146
    %180 = vst [vmem:[#allocation5 + $0xf8] sm:$0xff] %v148
    // Predicated region
    $region10: #{tpu_custom_call.1} parent=1 // pred_check
      _
    $region11: #{tpu_custom_call.1} parent=1 // pred_check_branch
      %182 = sbr.rel (0) target = $region13
    $region12: #{tpu_custom_call.1} parent=1 // pred_region
      %s184 = ssub.s32 4096, 4096
      %185 = vsyncadd [#allocation4], %s184
      %s187 = sshll.u32 [#allocation5], 4
      %s188 = int_to_ptr.vmem [resolvable:$true] %s187
      %190 = dma.vmem_to_hbm [thread:$0]  %s188, 4096, %s1, [#allocation4]
    $region13: #{tpu_custom_call.1} parent=1 // pred_fallthru
      _
    // Predicated region
    $region14: #{tpu_custom_call.1} parent=1 // pred_check
      _
    $region15: #{tpu_custom_call.1} parent=1 // pred_check_branch
      %192 = sbr.rel (0) target = $region17
    $region16: #{tpu_custom_call.1} parent=1 // pred_region
      %193 = dma.done [#allocation4], 4096
    $region17: #{tpu_custom_call.1} parent=1 // pred_fallthru
      _
    %194 = vsyncpa [#allocation3], 1
    %195 = vsyncpa [#allocation4], 1

</llo_original>
